<compile_context>
chip_gen: v7x
topology: tpu7x:2x2x1
jax: 0.10.0
libtpu: 0.0.40
codegen_flags: <defaults>
</compile_context>

<pallas_src>
import jax
import jax.numpy as jnp
from jax.experimental import pallas as pl
from jax.experimental.pallas import tpu as pltpu

HIDDEN = 32        # width of l1 / l2 (fixed by the PyTorch module)
LANE = 128         # TPU lane width; batch tiles are multiples of this
MAX_TILE_B = 8192  # batch rows (lanes) per grid step


def _cdiv(a, b):
    return -(-a // b)


def _round_up(x, m):
    return _cdiv(x, m) * m


def _choose_tiling(batch):
    """Pick (tile_b, num_blocks): tile_b is a multiple of 128 lanes, fitted to
    the batch to minimise tail padding, with >=2 blocks for large batches so
    the parallel batch axis can split across v7x's two TensorCores."""
    min_blocks = 2 if batch >= 2 * LANE else 1
    num_blocks = max(min_blocks, _cdiv(batch, MAX_TILE_B))
    tile_b = _round_up(_cdiv(batch, num_blocks), LANE)
    num_blocks = _cdiv(batch, tile_b)
    return tile_b, num_blocks


def critic_kernel(xt_ref, w1_ref, w2q_ref, w2x_ref, w3_ref, b1_ref, b2_ref,
                  b3_ref, out_ref):
    """Feature-major tile: activations are [features, tile_b] (batch on lanes).

    q   = relu(W1p @ X + b1)            [32, tile_b]
    h   = relu(W2q @ q + W2x @ X + b2)  [32, tile_b]   (== cat([q, a]) @ W2)
    out = w3 @ h + b3                   [ 1, tile_b]   lane-dense head row
    """
    xt = xt_ref[...]                                     # [F, tile_b] bf16

    # layer 1: bf16 MXU matmul, f32 accumulation, f32 bias + ReLU on the VPU
    q = jnp.dot(w1_ref[...], xt, preferred_element_type=jnp.float32)
    q = jnp.maximum(q + b1_ref[...], 0.0)                # [32, tile_b] f32

    # layer 2: cat([q, a], 1) @ W2  ==  W2q @ q + W2x @ X  (no in-kernel concat)
    h = jnp.dot(w2q_ref[...], q.astype(jnp.bfloat16),
                preferred_element_type=jnp.float32)
    h = h + jnp.dot(w2x_ref[...], xt, preferred_element_type=jnp.float32)
    h = jnp.maximum(h + b2_ref[...], 0.0)                # [32, tile_b] f32

    # layer 3 head: [1,32] @ [32,tile_b] -> [1,tile_b] (f32).  Result is
    # lane-dense, so the store is an unmasked, contiguous vector store.
    out = jnp.dot(w3_ref[...], h, preferred_element_type=jnp.float32)
    out_ref[...] = (out + b3_ref[0, 0]).astype(out_ref.dtype)


def prepare_critic_params(params):
    """One-time packing of the f32 training params into feature-major
    (transposed) kernel operands; matmul operands cast to bf16 once here."""
    state_dim = params["w1"].shape[0]
    feat = state_dim + (params["w2"].shape[0] - HIDDEN)

    # l1: [in, out] -> [out, feat], zero over the action rows of the merged X
    w1t = jnp.zeros((HIDDEN, feat), jnp.float32)
    w1t = w1t.at[:, :state_dim].set(params["w1"].T)
    # l2 split: q half is [out, 32]; action half scattered into [out, feat]
    w2q = params["w2"][:HIDDEN, :].T
    w2x = jnp.zeros((HIDDEN, feat), jnp.float32)
    w2x = w2x.at[:, state_dim:].set(params["w2"][HIDDEN:, :].T)

    return {
        "w1t": w1t.astype(jnp.bfloat16),                            # [32, F]
        "w2q": w2q.astype(jnp.bfloat16),                            # [32, 32]
        "w2x": w2x.astype(jnp.bfloat16),                            # [32, F]
        "w3": params["w3"].T.astype(jnp.float32),                   # [1, 32]
        "b1": params["b1"].reshape(HIDDEN, 1).astype(jnp.float32),  # [32, 1]
        "b2": params["b2"].reshape(HIDDEN, 1).astype(jnp.float32),  # [32, 1]
        "b3": params["b3"].reshape(1, 1).astype(jnp.float32),       # [1,1] SMEM
    }


@jax.jit
def critic_forward(state, action, prep):
    """state: [B, state_dim], action: [B, action_dim] -> q-value [B, 1] f32."""
    B, state_dim = state.shape
    action_dim = action.shape[1]
    feat = state_dim + action_dim

    tile_b, num_blocks = _choose_tiling(B)
    b_pad = tile_b * num_blocks

    # Single fused prep pass: merge state|action, pad the ragged batch tail,
    # go feature-major (batch -> lanes) and cast the matmul operand to bf16.
    xa = jnp.concatenate([state, action], axis=1)        # [B, F] f32
    xa = jnp.pad(xa, ((0, b_pad - B), (0, 0)))
    xt = xa.astype(jnp.bfloat16).T                       # [F, b_pad] bf16

    out = pl.pallas_call(
        critic_kernel,
        out_shape=jax.ShapeDtypeStruct((1, b_pad), jnp.float32),
        grid=(num_blocks,),
        in_specs=[
            # batch-tiled activations (auto double-buffered pipeline)
            pl.BlockSpec((feat, tile_b), lambda i: (0, i)),
            # weights / biases: constant index_map -> fetched once, resident
            pl.BlockSpec((HIDDEN, feat), lambda i: (0, 0)),
            pl.BlockSpec((HIDDEN, HIDDEN), lambda i: (0, 0)),
            pl.BlockSpec((HIDDEN, feat), lambda i: (0, 0)),
            pl.BlockSpec((1, HIDDEN), lambda i: (0, 0)),
            pl.BlockSpec((HIDDEN, 1), lambda i: (0, 0)),
            pl.BlockSpec((HIDDEN, 1), lambda i: (0, 0)),
            # scalar output bias in SMEM
            pl.BlockSpec(memory_space=pltpu.MemorySpace.SMEM),
        ],
        out_specs=pl.BlockSpec((1, tile_b), lambda i: (0, i)),
        compiler_params=pltpu.CompilerParams(
            dimension_semantics=("parallel",),   # batch axis over TCs (v7x)
            vmem_limit_bytes=32 * 1024 * 1024,   # safe on v5e/v6e and v7x
        ),
    )(xt, prep["w1t"], prep["w2q"], prep["w2x"], prep["w3"], prep["b1"],
      prep["b2"], prep["b3"])

    # padded tail columns hold relu(b1)-driven garbage; discard them here
    return out[0, :B].reshape(B, 1)


def init_params(key, state_dim, action_dim):
    """Deterministic synthetic init matching the PyTorch module's shapes.
    Weights stored as [in, out] (transpose of torch's [out, in])."""
    k1, k2, k3, k4, k5, k6 = jax.random.split(key, 6)

    def u(k, shape, fan_in):
        bound = 1.0 / jnp.sqrt(fan_in)
        return jax.random.uniform(k, shape, jnp.float32, -bound, bound)

    return {
        "w1": u(k1, (state_dim, HIDDEN), state_dim),
        "b1": u(k2, (HIDDEN,), state_dim),
        "w2": u(k3, (HIDDEN + action_dim, HIDDEN), HIDDEN + action_dim),
        "b2": u(k4, (HIDDEN,), HIDDEN + action_dim),
        "w3": u(k5, (HIDDEN, 1), HIDDEN),
        "b3": u(k6, (1,), HIDDEN),
    }


def critic_reference(state, action, params):
    q = jnp.maximum(state @ params["w1"] + params["b1"], 0.0)
    x = jnp.concatenate([q, action], axis=1)
    h = jnp.maximum(x @ params["w2"] + params["b2"], 0.0)
    return h @ params["w3"] + params["b3"]


if __name__ == "__main__":
    state_dim, action_dim = 16, 4

    key = jax.random.PRNGKey(0)
    kp, kin = jax.random.split(key)
    params = init_params(kp, state_dim, action_dim)
    prep = prepare_critic_params(params)

    # batch=8 / 50: single padded 128-lane tile (ragged tails);
    # batch=300: two grid blocks (exercises the >=2-block v7x path + tail).
    for batch in (8, 50, 300):
        kb = jax.random.fold_in(kin, batch)
        ks, ka = jax.random.split(kb)
        state = jax.random.normal(ks, (batch, state_dim), jnp.float32)
        action = jax.random.normal(ka, (batch, action_dim), jnp.float32)

        out = critic_forward(state, action, prep)
        jax.block_until_ready(out)

        ref = critic_reference(state, action, params)
        assert out.shape == (batch, 1), out.shape
        # bf16 matmul operands -> slightly looser tolerance vs f32 reference
        assert jnp.allclose(out, ref, atol=3e-2, rtol=3e-2), (
            batch, float(jnp.max(jnp.abs(out - ref))))

    print("KERNEL_OK")
</pallas_src>

<mosaic_0001>
module attributes {stable_mosaic.version = 11 : i64} {
  func.func @critic_kernel(%arg0: i32, %arg1: memref<20x128xbf16, #tpu.memory_space<vmem>>, %arg2: memref<32x20xbf16, #tpu.memory_space<vmem>>, %arg3: memref<32x32xbf16, #tpu.memory_space<vmem>>, %arg4: memref<32x20xbf16, #tpu.memory_space<vmem>>, %arg5: memref<1x32xf32, #tpu.memory_space<vmem>>, %arg6: memref<32x1xf32, #tpu.memory_space<vmem>>, %arg7: memref<32x1xf32, #tpu.memory_space<vmem>>, %arg8: memref<1x1xf32, #tpu.memory_space<smem>>, %arg9: memref<1x128xf32, #tpu.memory_space<vmem>>) attributes {dimension_semantics = [#tpu.dimension_semantics<parallel>], iteration_bounds = array<i64: 1>, scalar_prefetch = 0 : i64, scratch_operands = 0 : i64, tpu.core_type = #tpu.core_type<tc>, window_params = [{transform_indices = @transform_0, window_bounds = array<i64: 20, 128>}, {pipeline_mode = #tpu.pipeline_mode<synchronous>, transform_indices = @transform_1, window_bounds = array<i64: 32, 20>}, {pipeline_mode = #tpu.pipeline_mode<synchronous>, transform_indices = @transform_2, window_bounds = array<i64: 32, 32>}, {pipeline_mode = #tpu.pipeline_mode<synchronous>, transform_indices = @transform_3, window_bounds = array<i64: 32, 20>}, {pipeline_mode = #tpu.pipeline_mode<synchronous>, transform_indices = @transform_4, window_bounds = array<i64: 1, 32>}, {pipeline_mode = #tpu.pipeline_mode<synchronous>, transform_indices = @transform_5, window_bounds = array<i64: 32, 1>}, {pipeline_mode = #tpu.pipeline_mode<synchronous>, transform_indices = @transform_6, window_bounds = array<i64: 32, 1>}, {transform_indices = @transform_7, window_bounds = array<i64: 1, 1>}, {transform_indices = @transform_8, window_bounds = array<i64: 1, 128>}]} {
    %c0 = arith.constant 0 : index
    %c0_0 = arith.constant 0 : index
    %0 = vector.load %arg1[%c0, %c0_0] : memref<20x128xbf16, #tpu.memory_space<vmem>>, vector<20x128xbf16>
    %c0_1 = arith.constant 0 : index
    %c0_2 = arith.constant 0 : index
    %1 = vector.load %arg2[%c0_1, %c0_2] : memref<32x20xbf16, #tpu.memory_space<vmem>>, vector<32x20xbf16>
    %cst = arith.constant dense<0.000000e+00> : vector<32x128xf32>
    %2 = tpu.matmul %1, %0, %cst {dimension_numbers = #tpu.dot_dimension_numbers<[1], [0], [0], [1], [0, 0, 1, 1], [], []>} : vector<32x20xbf16>, vector<20x128xbf16>, vector<32x128xf32> -> vector<32x128xf32>
    %c0_3 = arith.constant 0 : index
    %c0_4 = arith.constant 0 : index
    %3 = vector.load %arg6[%c0_3, %c0_4] : memref<32x1xf32, #tpu.memory_space<vmem>>, vector<32x1xf32>
    %4 = vector.broadcast %3 : vector<32x1xf32> to vector<32x128xf32>
    %5 = arith.addf %2, %4 : vector<32x128xf32>
    %cst_5 = arith.constant 0.000000e+00 : f32
    %6 = vector.broadcast %cst_5 : f32 to vector<32x128xf32>
    %7 = arith.maximumf %5, %6 : vector<32x128xf32>
    %c0_6 = arith.constant 0 : index
    %c0_7 = arith.constant 0 : index
    %8 = vector.load %arg3[%c0_6, %c0_7] : memref<32x32xbf16, #tpu.memory_space<vmem>>, vector<32x32xbf16>
    %9 = arith.truncf %7 : vector<32x128xf32> to vector<32x128xbf16>
    %cst_8 = arith.constant dense<0.000000e+00> : vector<32x128xf32>
    %10 = tpu.matmul %8, %9, %cst_8 {dimension_numbers = #tpu.dot_dimension_numbers<[1], [0], [0], [1], [0, 0, 1, 1], [], []>} : vector<32x32xbf16>, vector<32x128xbf16>, vector<32x128xf32> -> vector<32x128xf32>
    %c0_9 = arith.constant 0 : index
    %c0_10 = arith.constant 0 : index
    %11 = vector.load %arg4[%c0_9, %c0_10] : memref<32x20xbf16, #tpu.memory_space<vmem>>, vector<32x20xbf16>
    %cst_11 = arith.constant dense<0.000000e+00> : vector<32x128xf32>
    %12 = tpu.matmul %11, %0, %cst_11 {dimension_numbers = #tpu.dot_dimension_numbers<[1], [0], [0], [1], [0, 0, 1, 1], [], []>} : vector<32x20xbf16>, vector<20x128xbf16>, vector<32x128xf32> -> vector<32x128xf32>
    %13 = arith.addf %10, %12 : vector<32x128xf32>
    %c0_12 = arith.constant 0 : index
    %c0_13 = arith.constant 0 : index
    %14 = vector.load %arg7[%c0_12, %c0_13] : memref<32x1xf32, #tpu.memory_space<vmem>>, vector<32x1xf32>
    %15 = vector.broadcast %14 : vector<32x1xf32> to vector<32x128xf32>
    %16 = arith.addf %13, %15 : vector<32x128xf32>
    %cst_14 = arith.constant 0.000000e+00 : f32
    %17 = vector.broadcast %cst_14 : f32 to vector<32x128xf32>
    %18 = arith.maximumf %16, %17 : vector<32x128xf32>
    %c0_15 = arith.constant 0 : index
    %c0_16 = arith.constant 0 : index
    %19 = vector.load %arg5[%c0_15, %c0_16] : memref<1x32xf32, #tpu.memory_space<vmem>>, vector<1x32xf32>
    %cst_17 = arith.constant dense<0.000000e+00> : vector<1x128xf32>
    %20 = tpu.matmul %19, %18, %cst_17 {dimension_numbers = #tpu.dot_dimension_numbers<[1], [0], [0], [1], [0, 0, 1, 1], [], []>} : vector<1x32xf32>, vector<32x128xf32>, vector<1x128xf32> -> vector<1x128xf32>
    %c0_18 = arith.constant 0 : index
    %c0_19 = arith.constant 0 : index
    %21 = memref.load %arg8[%c0_18, %c0_19] : memref<1x1xf32, #tpu.memory_space<smem>>
    %22 = vector.broadcast %21 : f32 to vector<1x128xf32>
    %23 = arith.addf %20, %22 : vector<1x128xf32>
    %c0_20 = arith.constant 0 : index
    %c0_21 = arith.constant 0 : index
    %24 = vector.load %arg9[%c0_20, %c0_21] : memref<1x128xf32, #tpu.memory_space<vmem>>, vector<1x128xf32>
    tpu.vector_store %arg9[%c0_20, %c0_21], %23 {strides = array<i32>} : memref<1x128xf32, #tpu.memory_space<vmem>>, vector<1x128xf32>,
    return
  }
  func.func @transform_0(%arg0: i32) -> (i32, i32) {
    %c0_i32 = arith.constant 0 : i32
    %c0_i32_0 = arith.constant 0 : i32
    return %c0_i32, %arg0 : i32, i32
  }
  func.func @transform_1(%arg0: i32) -> (i32, i32) {
    %c0_i32 = arith.constant 0 : i32
    %c0_i32_0 = arith.constant 0 : i32
    %c0_i32_1 = arith.constant 0 : i32
    return %c0_i32, %c0_i32_0 : i32, i32
  }
  func.func @transform_2(%arg0: i32) -> (i32, i32) {
    %c0_i32 = arith.constant 0 : i32
    %c0_i32_0 = arith.constant 0 : i32
    %c0_i32_1 = arith.constant 0 : i32
    return %c0_i32, %c0_i32_0 : i32, i32
  }
  func.func @transform_3(%arg0: i32) -> (i32, i32) {
    %c0_i32 = arith.constant 0 : i32
    %c0_i32_0 = arith.constant 0 : i32
    %c0_i32_1 = arith.constant 0 : i32
    return %c0_i32, %c0_i32_0 : i32, i32
  }
  func.func @transform_4(%arg0: i32) -> (i32, i32) {
    %c0_i32 = arith.constant 0 : i32
    %c0_i32_0 = arith.constant 0 : i32
    %c0_i32_1 = arith.constant 0 : i32
    return %c0_i32, %c0_i32_0 : i32, i32
  }
  func.func @transform_5(%arg0: i32) -> (i32, i32) {
    %c0_i32 = arith.constant 0 : i32
    %c0_i32_0 = arith.constant 0 : i32
    %c0_i32_1 = arith.constant 0 : i32
    return %c0_i32, %c0_i32_0 : i32, i32
  }
  func.func @transform_6(%arg0: i32) -> (i32, i32) {
    %c0_i32 = arith.constant 0 : i32
    %c0_i32_0 = arith.constant 0 : i32
    %c0_i32_1 = arith.constant 0 : i32
    return %c0_i32, %c0_i32_0 : i32, i32
  }
  func.func @transform_7(%arg0: i32) -> (i32, i32) {
    %c0_i32 = arith.constant 0 : i32
    %c0_i32_0 = arith.constant 0 : i32
    %c0_i32_1 = arith.constant 0 : i32
    return %c0_i32, %c0_i32_0 : i32, i32
  }
  func.func @transform_8(%arg0: i32) -> (i32, i32) {
    %c0_i32 = arith.constant 0 : i32
    %c0_i32_0 = arith.constant 0 : i32
    return %c0_i32, %arg0 : i32, i32
  }
}

</mosaic_0001>

<llo_original>
// kernel: critic_forward.1
$region0: #{critic_forward.1}
  #allocation0 [shape = 'u32[]', space=smem, size = 0x4, offset = 0x4, fixed_abs, tag = 'smem constant byte address 0x4 - core index']
  #allocation1 [shape = 'u32[144,128]{1,0:T(1,128)}', space=vmem, size = 0x12000, scoped, tag = 'internal scratch']
  #allocation2 [shape = 'f32[1,1]{1,0:T(1,128)S(6)}', space=smem, size = 0x200, scoped, tag = 'scoped memory for critic_forward.1']
  %s0 = inlined_call_operand.vmem [shape: bf16[20,128], index: 0, kind: input, shape index: {}]
  %s1 = inlined_call_operand.vmem [shape: bf16[32,20], index: 1, kind: input, shape index: {}]
  %s2 = inlined_call_operand.vmem [shape: bf16[32,32], index: 2, kind: input, shape index: {}]
  %s3 = inlined_call_operand.vmem [shape: bf16[32,20], index: 3, kind: input, shape index: {}]
  %s4 = inlined_call_operand.vmem [shape: f32[1,32], index: 4, kind: input, shape index: {}]
  %s5 = inlined_call_operand.vmem [shape: f32[32,1], index: 5, kind: input, shape index: {}]
  %s6 = inlined_call_operand.vmem [shape: f32[32,1], index: 6, kind: input, shape index: {}]
  %s7 = inlined_call_operand.<no memory space> [shape: f32[1,1], index: 7, kind: input, shape index: {}]
  %s8 = inlined_call_operand.vmem [shape: f32[1,128], index: 8, kind: output, shape index: {}]
  %s9 = sld [smem:[#allocation0]]
  $region42: #{critic_forward.1} parent=0
    _
  %s11 = ssub.s32 1, %s9
  %s12 = scalar_select 0, %s11, %s9
  %13 = sst [smem:[#allocation2]] %s7
  // Predicated region
  $region2: #{critic_forward.1} parent=0 // pred_check
    _
  $region3: #{critic_forward.1} parent=0 // pred_check_branch
    %15 = sbr.rel (0) target = $region5
  $region4: #{critic_forward.1} parent=0 // pred_region
    _
  $region5: #{critic_forward.1} parent=0 // pred_fallthru
    _
  // Predicated region
  $region6: #{critic_forward.1} parent=0 // pred_check
    _
  $region7: #{critic_forward.1} parent=0 // pred_check_branch
    %17 = sbr.rel (0) target = $region9
  $region8: #{critic_forward.1} parent=0 // pred_region
    _
  $region9: #{critic_forward.1} parent=0 // pred_fallthru
    _
  // Predicated region
  $region10: #{critic_forward.1} parent=0 // pred_check
    _
  $region11: #{critic_forward.1} parent=0 // pred_check_branch
    %19 = sbr.rel (0) target = $region13
  $region12: #{critic_forward.1} parent=0 // pred_region
    _
  $region13: #{critic_forward.1} parent=0 // pred_fallthru
    _
  // Predicated region
  $region14: #{critic_forward.1} parent=0 // pred_check
    _
  $region15: #{critic_forward.1} parent=0 // pred_check_branch
    %21 = sbr.rel (0) target = $region17
  $region16: #{critic_forward.1} parent=0 // pred_region
    _
  $region17: #{critic_forward.1} parent=0 // pred_fallthru
    _
  // Predicated region
  $region18: #{critic_forward.1} parent=0 // pred_check
    _
  $region19: #{critic_forward.1} parent=0 // pred_check_branch
    %23 = sbr.rel (0) target = $region21
  $region20: #{critic_forward.1} parent=0 // pred_region
    _
  $region21: #{critic_forward.1} parent=0 // pred_fallthru
    _
  // Predicated region
  $region22: #{critic_forward.1} parent=0 // pred_check
    _
  $region23: #{critic_forward.1} parent=0 // pred_check_branch
    %25 = sbr.rel (0) target = $region25
  $region24: #{critic_forward.1} parent=0 // pred_region
    _
  $region25: #{critic_forward.1} parent=0 // pred_fallthru
    _
  // Predicated region
  $region26: #{critic_forward.1} parent=0 // pred_check
    _
  $region27: #{critic_forward.1} parent=0 // pred_check_branch
    %27 = sbr.rel (0) target = $region29
  $region28: #{critic_forward.1} parent=0 // pred_region
    _
  $region29: #{critic_forward.1} parent=0 // pred_fallthru
    _
  // Predicated region
  $region30: #{critic_forward.1} parent=0 // pred_check
    _
  $region31: #{critic_forward.1} parent=0 // pred_check_branch
    %29 = sbr.rel (0) target = $region33
  $region32: #{critic_forward.1} parent=0 // pred_region
    _
  $region33: #{critic_forward.1} parent=0 // pred_fallthru
    _
  %v31 = vld [vmem:[%s0] sm:$0xf]
  %v32 = vld [vmem:[%s0 + $0x4] sm:$0xf]
  %v33 = vld [vmem:[%s0 + $0x8] sm:$0x3]
  %v34 = vld [vmem:[%s1] sm:$0xf]
  %v35 = vld [vmem:[%s1 + $0x4] sm:$0xf]
  %v36 = vld [vmem:[%s1 + $0x8] sm:$0xf]
  %v37 = vld [vmem:[%s1 + $0xc] sm:$0xf]
  %v38 = vld [vmem:[%s5] sm:$0xff]
  %v39 = vld [vmem:[%s5 + $0x8] sm:$0xff]
  %v40 = vld [vmem:[%s5 + $0x10] sm:$0xff]
  %v41 = vld [vmem:[%s5 + $0x18] sm:$0xff]
  %43 = vset.pattern.permute.xlu0 0
  %44 = vperm.xlu0 %43, %v38
  %v45 = vpop.permute.xlu0 %44
  %48 = vset.pattern.permute.xlu0 0
  %49 = vperm.xlu0 %48, %v39
  %v50 = vpop.permute.xlu0 %49
  %53 = vset.pattern.permute.xlu0 0
  %54 = vperm.xlu0 %53, %v40
  %v55 = vpop.permute.xlu0 %54
  %58 = vset.pattern.permute.xlu0 0
  %59 = vperm.xlu0 %58, %v41
  %v60 = vpop.permute.xlu0 %59
  %v66 = vunpack.c.l.b16 %v34
  %v67 = vunpack.c.l.b16 %v35
  %v68 = vunpack.c.l.b16 %v36
  %v69 = vunpack.c.l.b16 %v37
  %v70 = vpack.c.b16 %v67, %v66
  %v71 = vpack.c.b16 %v69, %v68
  %v75 = vunpack.c.l.b16 %v31
  %v76 = vunpack.c.l.b16 %v32
  %v77 = vunpack.c.l.b16 %v33
  %v78 = vpack.c.b16 %v76, %v75
  %v79 = vpack.c.b16 %v77, %v77
  %vm81 = vcmask 162816
  %v83 = vsel %vm81, %v70, 0
  %v86 = vsel %vm81, %v71, 0
  %vm88 = vcmask 1041408
  %v90 = vsel %vm88, %v79, 0
  %92 = vmatprep.subr.bf16.mxu0 0
  %93 = vmatpush1.bf16.msra.mxu0 %v78
  %94 = vmatprep.subr.bf16.mxu0 0
  %95 = vmatpush1.bf16.msra.mxu0 %v90
  %96 = vmatprep.subr.bf16.mxu0 0
  %97 = vmatpush1.bf16.msra.mxu0 0
  %98 = vmatprep.subr.bf16.mxu0 0
  %99 = vmatpush1.bf16.msra.mxu0 0
  %100 = vmatprep.subr.bf16.mxu0 0
  %101 = vmatpush1.bf16.msra.mxu0 0
  %102 = vmatprep.subr.bf16.mxu0 0
  %103 = vmatpush1.bf16.msra.mxu0 0
  %104 = vmatprep.subr.bf16.mxu0 0
  %105 = vmatpush1.bf16.msra.mxu0 0
  %106 = vmatprep.subr.bf16.mxu0 0
  %107 = vmatpush1.bf16.msra.mxu0 0
  %108 = vmatprep.subr.bf16.mxu0 0
  %109 = vmatpush1.bf16.msra.mxu0 0
  %110 = vmatprep.subr.bf16.mxu0 0
  %111 = vmatpush1.bf16.msra.mxu0 0
  %112 = vmatprep.subr.bf16.mxu0 0
  %113 = vmatpush1.bf16.msra.mxu0 0
  %114 = vmatprep.subr.bf16.mxu0 0
  %115 = vmatpush1.bf16.msra.mxu0 0
  %116 = vmatprep.subr.bf16.mxu0 0
  %117 = vmatpush1.bf16.msra.mxu0 0
  %118 = vmatprep.subr.bf16.mxu0 0
  %119 = vmatpush1.bf16.msra.mxu0 0
  %120 = vmatprep.subr.bf16.mxu0 0
  %121 = vmatpush1.bf16.msra.mxu0 0
  %122 = vmatprep.subr.bf16.mxu0 0
  %123 = vmatpush1.bf16.msra.mxu0 0
  %124 = vmatprep.mubr.bf16.mxu0 0
  %125 = vmatmul.mubr.bf16.gmra.mrb[0].mxu0 %v83
  %v126 = vpop.f32.mrb[0].mxu0
  %v127 = vadd.f32 %v45, %v126
  %v128 = vpop.f32.mrb[0].mxu0
  %v129 = vpop.f32.mrb[0].mxu0
  %v130 = vadd.f32 %v50, %v129
  %v131 = vpop.f32.mrb[0].mxu0
  %132 = vmatprep.mubr.bf16.mxu0 0
  %133 = vmatmul.mubr.bf16.gmra.mrb[0].mxu0 %v86
  %v134 = vpop.f32.mrb[0].mxu0
  %v135 = vadd.f32 %v55, %v134
  %v136 = vpop.f32.mrb[0].mxu0
  %v137 = vpop.f32.mrb[0].mxu0
  %v138 = vadd.f32 %v60, %v137
  %v139 = vpop.f32.mrb[0].mxu0
  %140 = vdwg.mxu0
  %v141 = vmax.f32 %v127, 0.0
  %v142 = vmax.f32 %v130, 0.0
  %v143 = vmax.f32 %v135, 0.0
  %v144 = vmax.f32 %v138, 0.0
  %v145 = vld [vmem:[%s2] sm:$0xf]
  %v146 = vld [vmem:[%s2 + $0x4] sm:$0xf]
  %v147 = vld [vmem:[%s2 + $0x8] sm:$0xf]
  %v148 = vld [vmem:[%s2 + $0xc] sm:$0xf]
  %v149 = vpack.c.bf16 %v142, %v141
  %v150 = vpack.c.bf16 %v144, %v143
  %v151 = vld [vmem:[%s3] sm:$0xf]
  %v152 = vld [vmem:[%s3 + $0x4] sm:$0xf]
  %v153 = vld [vmem:[%s3 + $0x8] sm:$0xf]
  %v154 = vld [vmem:[%s3 + $0xc] sm:$0xf]
  %v159 = vunpack.c.l.b16 %v151
  %v160 = vunpack.c.l.b16 %v152
  %v161 = vunpack.c.l.b16 %v153
  %v162 = vunpack.c.l.b16 %v154
  %v163 = vpack.c.b16 %v160, %v159
  %v164 = vpack.c.b16 %v162, %v161
  %v166 = vsel %vm81, %v163, 0
  %v169 = vsel %vm81, %v164, 0
  %171 = vmatprep.subr.bf16.mxu0 0
  %172 = vmatpush1.bf16.msra.mxu0 %v78
  %173 = vmatprep.subr.bf16.mxu0 0
  %174 = vmatpush1.bf16.msra.mxu0 %v90
  %175 = vmatprep.subr.bf16.mxu0 0
  %176 = vmatpush1.bf16.msra.mxu0 0
  %177 = vmatprep.subr.bf16.mxu0 0
  %178 = vmatpush1.bf16.msra.mxu0 0
  %179 = vmatprep.subr.bf16.mxu0 0
  %180 = vmatpush1.bf16.msra.mxu0 0
  %181 = vmatprep.subr.bf16.mxu0 0
  %182 = vmatpush1.bf16.msra.mxu0 0
  %183 = vmatprep.subr.bf16.mxu0 0
  %184 = vmatpush1.bf16.msra.mxu0 0
  %185 = vmatprep.subr.bf16.mxu0 0
  %186 = vmatpush1.bf16.msra.mxu0 0
  %187 = vmatprep.subr.bf16.mxu0 0
  %188 = vmatpush1.bf16.msra.mxu0 0
  %189 = vmatprep.subr.bf16.mxu0 0
  %190 = vmatpush1.bf16.msra.mxu0 0
  %191 = vmatprep.subr.bf16.mxu0 0
  %192 = vmatpush1.bf16.msra.mxu0 0
  %193 = vmatprep.subr.bf16.mxu0 0
  %194 = vmatpush1.bf16.msra.mxu0 0
  %195 = vmatprep.subr.bf16.mxu0 0
  %196 = vmatpush1.bf16.msra.mxu0 0
  %197 = vmatprep.subr.bf16.mxu0 0
  %198 = vmatpush1.bf16.msra.mxu0 0
  %199 = vmatprep.subr.bf16.mxu0 0
  %200 = vmatpush1.bf16.msra.mxu0 0
  %201 = vmatprep.subr.bf16.mxu0 0
  %202 = vmatpush1.bf16.msra.mxu0 0
  %203 = vmatprep.mubr.bf16.mxu0 0
  %204 = vmatmul.mubr.bf16.gmra.mrb[0].mxu0 %v166
  %v205 = vpop.f32.mrb[0].mxu0
  %v206 = vadd.f32 0.0, %v205
  %v207 = vpop.f32.mrb[0].mxu0
  %v208 = vpop.f32.mrb[0].mxu0
  %v209 = vadd.f32 0.0, %v208
  %v210 = vpop.f32.mrb[0].mxu0
  %211 = vmatprep.mubr.bf16.mxu0 0
  %212 = vmatmul.mubr.bf16.gmra.mrb[0].mxu0 %v169
  %v213 = vpop.f32.mrb[0].mxu0
  %v214 = vadd.f32 0.0, %v213
  %v215 = vpop.f32.mrb[0].mxu0
  %v216 = vpop.f32.mrb[0].mxu0
  %v217 = vadd.f32 0.0, %v216
  %v218 = vpop.f32.mrb[0].mxu0
  %219 = vdwg.mxu0
  %v224 = vunpack.c.l.b16 %v145
  %v225 = vunpack.c.l.b16 %v146
  %v226 = vunpack.c.l.b16 %v147
  %v227 = vunpack.c.l.b16 %v148
  %v228 = vpack.c.b16 %v225, %v224
  %v229 = vpack.c.b16 %v227, %v226
  %vm230 = vcmask 261120
  %v232 = vsel %vm230, %v228, 0
  %v235 = vsel %vm230, %v229, 0
  %237 = vmatprep.subr.bf16.mxu0 0
  %238 = vmatpush1.bf16.msra.mxu0 %v149
  %239 = vmatprep.subr.bf16.mxu0 0
  %240 = vmatpush1.bf16.msra.mxu0 %v150
  %241 = vmatprep.subr.bf16.mxu0 0
  %242 = vmatpush1.bf16.msra.mxu0 0
  %243 = vmatprep.subr.bf16.mxu0 0
  %244 = vmatpush1.bf16.msra.mxu0 0
  %245 = vmatprep.subr.bf16.mxu0 0
  %246 = vmatpush1.bf16.msra.mxu0 0
  %247 = vmatprep.subr.bf16.mxu0 0
  %248 = vmatpush1.bf16.msra.mxu0 0
  %249 = vmatprep.subr.bf16.mxu0 0
  %250 = vmatpush1.bf16.msra.mxu0 0
  %251 = vmatprep.subr.bf16.mxu0 0
  %252 = vmatpush1.bf16.msra.mxu0 0
  %253 = vmatprep.subr.bf16.mxu0 0
  %254 = vmatpush1.bf16.msra.mxu0 0
  %255 = vmatprep.subr.bf16.mxu0 0
  %256 = vmatpush1.bf16.msra.mxu0 0
  %257 = vmatprep.subr.bf16.mxu0 0
  %258 = vmatpush1.bf16.msra.mxu0 0
  %259 = vmatprep.subr.bf16.mxu0 0
  %260 = vmatpush1.bf16.msra.mxu0 0
  %261 = vmatprep.subr.bf16.mxu0 0
  %262 = vmatpush1.bf16.msra.mxu0 0
  %263 = vmatprep.subr.bf16.mxu0 0
  %264 = vmatpush1.bf16.msra.mxu0 0
  %265 = vmatprep.subr.bf16.mxu0 0
  %266 = vmatpush1.bf16.msra.mxu0 0
  %267 = vmatprep.subr.bf16.mxu0 0
  %268 = vmatpush1.bf16.msra.mxu0 0
  %269 = vmatprep.mubr.bf16.mxu0 0
  %270 = vmatmul.mubr.bf16.gmra.mrb[0].mxu0 %v232
  %v271 = vpop.f32.mrb[0].mxu0
  %v272 = vadd.f32 %v206, %v271
  %v273 = vpop.f32.mrb[0].mxu0
  %v274 = vpop.f32.mrb[0].mxu0
  %v275 = vadd.f32 %v209, %v274
  %v276 = vpop.f32.mrb[0].mxu0
  %277 = vmatprep.mubr.bf16.mxu0 0
  %278 = vmatmul.mubr.bf16.gmra.mrb[0].mxu0 %v235
  %v279 = vpop.f32.mrb[0].mxu0
  %v280 = vadd.f32 %v214, %v279
  %v281 = vpop.f32.mrb[0].mxu0
  %v282 = vpop.f32.mrb[0].mxu0
  %v283 = vadd.f32 %v217, %v282
  %v284 = vpop.f32.mrb[0].mxu0
  %285 = vdwg.mxu0
  %v286 = vld [vmem:[%s6] sm:$0xff]
  %v287 = vld [vmem:[%s6 + $0x8] sm:$0xff]
  %v288 = vld [vmem:[%s6 + $0x10] sm:$0xff]
  %v289 = vld [vmem:[%s6 + $0x18] sm:$0xff]
  %291 = vset.pattern.permute.xlu0 0
  %292 = vperm.xlu0 %291, %v286
  %v293 = vpop.permute.xlu0 %292
  %296 = vset.pattern.permute.xlu0 0
  %297 = vperm.xlu0 %296, %v287
  %v298 = vpop.permute.xlu0 %297
  %301 = vset.pattern.permute.xlu0 0
  %302 = vperm.xlu0 %301, %v288
  %v303 = vpop.permute.xlu0 %302
  %306 = vset.pattern.permute.xlu0 0
  %307 = vperm.xlu0 %306, %v289
  %v308 = vpop.permute.xlu0 %307
  %v310 = vadd.f32 %v272, %v293
  %v311 = vadd.f32 %v275, %v298
  %v312 = vadd.f32 %v280, %v303
  %v313 = vadd.f32 %v283, %v308
  %v314 = vmax.f32 %v310, 0.0
  %v315 = vmax.f32 %v311, 0.0
  %v316 = vmax.f32 %v312, 0.0
  %v317 = vmax.f32 %v313, 0.0
  %v318 = vld [vmem:[%s4] sm:$0x1]
  %s319 = sld [smem:[#allocation2]]
  %v320 = vstv %s319
  %v322 = vsel %vm230, %v318, 0
  %324 = vmatprep.subr.mxu0 0.0
  %325 = vmatpush1.msra.mxu0 %v314
  %326 = vmatprep.subr.mxu0 0.0
  %327 = vmatpush1.msra.mxu0 %v315
  %328 = vmatprep.subr.mxu0 0.0
  %329 = vmatpush1.msra.mxu0 %v316
  %330 = vmatprep.subr.mxu0 0.0
  %331 = vmatpush1.msra.mxu0 %v317
  %332 = vmatprep.subr.mxu0 0.0
  %333 = vmatpush1.msra.mxu0 0.0
  %334 = vmatprep.subr.mxu0 0.0
  %335 = vmatpush1.msra.mxu0 0.0
  %336 = vmatprep.subr.mxu0 0.0
  %337 = vmatpush1.msra.mxu0 0.0
  %338 = vmatprep.subr.mxu0 0.0
  %339 = vmatpush1.msra.mxu0 0.0
  %340 = vmatprep.subr.mxu0 0.0
  %341 = vmatpush1.msra.mxu0 0.0
  %342 = vmatprep.subr.mxu0 0.0
  %343 = vmatpush1.msra.mxu0 0.0
  %344 = vmatprep.subr.mxu0 0.0
  %345 = vmatpush1.msra.mxu0 0.0
  %346 = vmatprep.subr.mxu0 0.0
  %347 = vmatpush1.msra.mxu0 0.0
  %348 = vmatprep.subr.mxu0 0.0
  %349 = vmatpush1.msra.mxu0 0.0
  %350 = vmatprep.subr.mxu0 0.0
  %351 = vmatpush1.msra.mxu0 0.0
  %352 = vmatprep.subr.mxu0 0.0
  %353 = vmatpush1.msra.mxu0 0.0
  %354 = vmatprep.subr.mxu0 0.0
  %355 = vmatpush1.msra.mxu0 0.0
  %356 = vmatprep.subr.mxu0 0.0
  %357 = vmatpush1.msra.mxu0 0.0
  %358 = vmatprep.subr.mxu0 0.0
  %359 = vmatpush1.msra.mxu0 0.0
  %360 = vmatprep.subr.mxu0 0.0
  %361 = vmatpush1.msra.mxu0 0.0
  %362 = vmatprep.subr.mxu0 0.0
  %363 = vmatpush1.msra.mxu0 0.0
  %364 = vmatprep.subr.mxu0 0.0
  %365 = vmatpush1.msra.mxu0 0.0
  %366 = vmatprep.subr.mxu0 0.0
  %367 = vmatpush1.msra.mxu0 0.0
  %368 = vmatprep.subr.mxu0 0.0
  %369 = vmatpush1.msra.mxu0 0.0
  %370 = vmatprep.subr.mxu0 0.0
  %371 = vmatpush1.msra.mxu0 0.0
  %372 = vmatprep.subr.mxu0 0.0
  %373 = vmatpush1.msra.mxu0 0.0
  %374 = vmatprep.subr.mxu0 0.0
  %375 = vmatpush1.msra.mxu0 0.0
  %376 = vmatprep.subr.mxu0 0.0
  %377 = vmatpush1.msra.mxu0 0.0
  %378 = vmatprep.subr.mxu0 0.0
  %379 = vmatpush1.msra.mxu0 0.0
  %380 = vmatprep.subr.mxu0 0.0
  %381 = vmatpush1.msra.mxu0 0.0
  %382 = vmatprep.subr.mxu0 0.0
  %383 = vmatpush1.msra.mxu0 0.0
  %384 = vmatprep.subr.mxu0 0.0
  %385 = vmatpush1.msra.mxu0 0.0
  %386 = vmatprep.subr.mxu0 0.0
  %387 = vmatpush1.msra.mxu0 0.0
  %388 = vmatprep.mubr.f32.mxu0 0.0
  %389 = vmatmul.mubr.f32.gmra.mrb[0].mxu0 %v322
  %v390 = vpop.f32.mrb[0].mxu0
  %v391 = vadd.f32 %v320, %v390
  %v392 = vpop.f32.mrb[0].mxu0
  %393 = vdwg.mxu0
  %394 = vst [vmem:[%s8] sm:$0x1] %v391
  // Predicated region
  $region34: #{critic_forward.1} parent=0 // pred_check
    _
  $region35: #{critic_forward.1} parent=0 // pred_check_branch
    %396 = sbr.rel (0) target = $region37
  $region36: #{critic_forward.1} parent=0 // pred_region
    _
  $region37: #{critic_forward.1} parent=0 // pred_fallthru
    _
  // Predicated region
  $region38: #{critic_forward.1} parent=0 // pred_check
    _
  $region39: #{critic_forward.1} parent=0 // pred_check_branch
    %398 = sbr.rel (0) target = $region41
  $region40: #{critic_forward.1} parent=0 // pred_region
    _
  $region41: #{critic_forward.1} parent=0 // pred_fallthru
    _

</llo_original>
